<compile_context>
chip_gen: v6e
topology: v6e:2x2x1
jax: 0.10.0
libtpu: 0.0.40
codegen_flags: <defaults>
</compile_context>

<pallas_src>
import math

import jax
import jax.numpy as jnp
from jax.experimental import pallas as pl
from jax.experimental.pallas import tpu as pltpu


def _mha_pool_kernel(qsel_ref, selt_ref, wk_ref, bk_ref, wv_ref, bv_ref,
                     wo_ref, bo_ref, x_ref, out_ref):
    """One grid step == TB batch rows (full sequence resident in VMEM)."""
    tb, seq, emb = x_ref.shape

    # ---- batched K / V projections (bf16 MXU, f32 accumulation) ------------
    x2 = x_ref[...].reshape(tb * seq, emb).astype(jnp.bfloat16)       # (TB*S, E)
    k = jnp.dot(x2, wk_ref[...], preferred_element_type=jnp.float32) + bk_ref[...]
    v = jnp.dot(x2, wv_ref[...], preferred_element_type=jnp.float32) + bv_ref[...]

    # ---- per-head scores: q and 1/sqrt(head_dim) are folded into qsel ------
    # scores[s, h] = sum_e k[s, e] * q[e] * scale * sel[e, h]
    scores = jnp.dot(k, qsel_ref[...],
                     preferred_element_type=jnp.float32)              # (TB*S, H)

    selt = selt_ref[...]                                              # (H, E)

    # ---- per-row softmax (deferred normalization) + MXU pooling over S -----
    pooled_rows = []
    for b in range(tb):                                               # TB <= 8, unrolled
        lo = b * seq
        s_b = scores[lo:lo + seq, :]                                  # (S, H)
        v_b = v[lo:lo + seq, :]                                       # (S, E)
        m = jnp.max(s_b, axis=0, keepdims=True)                       # (1, H)
        p = jnp.exp(s_b - m)                                          # (S, H)
        denom = jnp.sum(p, axis=0, keepdims=True)                     # (1, H)
        # pooled-per-head values: contraction over the sequence on the MXU.
        ph = jax.lax.dot_general(p, v_b, (((0,), (0,)), ((), ())),
                                 preferred_element_type=jnp.float32)  # (H, E)
        # Each lane keeps its own head's row, normalized by that head's denom.
        inv_lanes = jnp.dot(1.0 / denom, selt,
                            preferred_element_type=jnp.float32)       # (1, E)
        pooled_rows.append(
            jnp.sum(selt * ph, axis=0, keepdims=True) * inv_lanes)    # (1, E)
    pooled = jnp.concatenate(pooled_rows, axis=0)                     # (TB, E)

    # ---- output projection: one (TB, E) @ (E, E) matmul for the whole tile --
    out = jnp.dot(pooled.astype(jnp.bfloat16), wo_ref[...],
                  preferred_element_type=jnp.float32) + bo_ref[...]   # (TB, E)
    out_ref[...] = out.astype(out_ref.dtype)


def multihead_attention_pooling(x, params, num_heads, *, batch_tile=8):
    """Mirror of MultiHeadAttentionPooling.forward: returns (batch, embed_dim)."""
    B, S, E = x.shape
    assert E % num_heads == 0, "embed_dim must be divisible by num_heads"
    H = num_heads
    head_dim = E // H
    scale = 1.0 / math.sqrt(head_dim)
    f32 = jnp.float32

    in_w = params["in_proj_weight"].astype(f32)          # (3E, E), PyTorch layout
    in_b = params["in_proj_bias"].astype(f32)            # (3E,)
    wq_t = in_w[:E].T                                     # x @ Wq^T == x @ wq_t
    wk_t = in_w[E:2 * E].T.astype(jnp.bfloat16)
    wv_t = in_w[2 * E:].T.astype(jnp.bfloat16)
    bq = in_b[:E].reshape(1, E)
    bk = in_b[E:2 * E].reshape(1, E)
    bv = in_b[2 * E:].reshape(1, E)
    wo_t = params["out_proj_weight"].astype(f32).T.astype(jnp.bfloat16)
    bo = params["out_proj_bias"].astype(f32).reshape(1, E)

    # Hoisted, batch-independent query projection (computed once in XLA).
    q = jnp.dot(params["query"].reshape(1, E).astype(f32), wq_t,
                precision=jax.lax.Precision.HIGHEST) + bq             # (1, E)

    # Fold q and the 1/sqrt(head_dim) scale into the head selector.
    head_of_lane = jnp.arange(E) // head_dim
    sel = (head_of_lane[:, None] == jnp.arange(H)[None, :]).astype(f32)  # (E, H)
    qsel = (q.reshape(E, 1) * scale) * sel                               # (E, H)
    sel_t = sel.T                                                        # (H, E)

    # Batch tiling: TB rows per grid step (pad batch up to a multiple of TB).
    TB = max(1, min(batch_tile, B))
    Bp = ((B + TB - 1) // TB) * TB
    x_p = jnp.pad(x, ((0, Bp - B), (0, 0), (0, 0))) if Bp != B else x
    n_steps = Bp // TB

    def _resident(shape):
        # Full-array block with a constant index -> DMA'd once, VMEM-resident.
        return pl.BlockSpec(shape, lambda b, _n=len(shape): (0,) * _n)

    # Advisory cost model (weights read once; activations streamed per tile).
    cost = pl.CostEstimate(
        flops=int(Bp * (4 * S * E * E          # k, v projections
                        + 2 * S * E * H        # scores
                        + 2 * S * H * E        # per-head pooling over S
                        + 2 * E * E            # output projection
                        + 8 * S * H + 6 * E)), # softmax / combine epsilon
        transcendentals=int(Bp * S * H),
        bytes_accessed=int(4 * Bp * S * E          # x
                           + 2 * 3 * E * E          # bf16 weights (once)
                           + 4 * (2 * E * H + 4 * E)  # qsel/selt + biases
                           + 4 * Bp * E),            # output
    )

    # Rough per-step VMEM working set (bytes), with generous headroom.
    work = (2 * TB * S * E * 4              # x tile, double-buffered, f32
            + 3 * E * E * 2 * 2             # wk/wv/wo bf16, double-buffered
            + 5 * TB * S * E * 4            # x(bf16) + k + v + scores temporaries
            + 2 * TB * E * 4                # output tile
            + (2 * E * H + 6 * E) * 4)      # qsel/selt + biases
    vmem_limit = int(min(64 * 1024 * 1024, max(32 * 1024 * 1024, 2 * work)))

    out = pl.pallas_call(
        _mha_pool_kernel,
        out_shape=jax.ShapeDtypeStruct((Bp, E), x.dtype),
        grid=(n_steps,),
        in_specs=[
            _resident((E, H)),                       # qsel (q & scale folded in)
            _resident((H, E)),                       # head selector, transposed
            _resident((E, E)),                       # wk_t (bf16)
            _resident((1, E)),                       # bk
            _resident((E, E)),                       # wv_t (bf16)
            _resident((1, E)),                       # bv
            _resident((E, E)),                       # wo_t (bf16)
            _resident((1, E)),                       # bo
            pl.BlockSpec((TB, S, E), lambda b: (b, 0, 0)),   # x, TB batch rows
        ],
        out_specs=pl.BlockSpec((TB, E), lambda b: (b, 0)),   # 2-D lane-dense output
        compiler_params=pltpu.CompilerParams(
            dimension_semantics=("parallel",),       # batch tiles are independent
            vmem_limit_bytes=vmem_limit,
        ),
        cost_estimate=cost,
    )(qsel, sel_t, wk_t, bk, wv_t, bv, wo_t, bo, x_p)

    return out[:B]                                   # (B, E)


def _reference(x, params, num_heads):
    """Pure-JAX (f32, highest precision) mirror of nn.MultiheadAttention pooling."""
    B, S, E = x.shape
    hd = E // num_heads
    in_w = params["in_proj_weight"]
    in_b = params["in_proj_bias"]
    wq, wk, wv = in_w[:E], in_w[E:2 * E], in_w[2 * E:]
    bq, bk, bv = in_b[:E], in_b[E:2 * E], in_b[2 * E:]
    with jax.default_matmul_precision("highest"):
        q = params["query"].reshape(1, E) @ wq.T + bq                 # (1, E)
        k = x @ wk.T + bk                                             # (B, S, E)
        v = x @ wv.T + bv
        qh = q.reshape(1, num_heads, hd)
        kh = k.reshape(B, S, num_heads, hd)
        vh = v.reshape(B, S, num_heads, hd)
        scores = jnp.einsum("qhd,bkhd->bhqk", qh, kh) / math.sqrt(hd)  # (B,H,1,S)
        attn = jax.nn.softmax(scores, axis=-1)
        o = jnp.einsum("bhqk,bkhd->bqhd", attn, vh).reshape(B, 1, E)
        out = o @ params["out_proj_weight"].T + params["out_proj_bias"]
    return out[:, 0, :]


if __name__ == "__main__":
    B, S, E, H = 2, 8, 32, 4

    key = jax.random.PRNGKey(0)
    k1, k2, k3, k4, k5, kx = jax.random.split(key, 6)
    params = {
        "in_proj_weight": jax.random.normal(k1, (3 * E, E), jnp.float32) / math.sqrt(E),
        "in_proj_bias": 0.02 * jax.random.normal(k2, (3 * E,), jnp.float32),
        "out_proj_weight": jax.random.normal(k3, (E, E), jnp.float32) / math.sqrt(E),
        "out_proj_bias": 0.02 * jax.random.normal(k4, (E,), jnp.float32),
        "query": jax.random.normal(k5, (1, 1, E), jnp.float32),
    }
    x = jax.random.normal(kx, (B, S, E), jnp.float32)

    fwd = jax.jit(multihead_attention_pooling, static_argnames=("num_heads",))
    out = jax.block_until_ready(fwd(x, params, num_heads=H))

    ref = _reference(x, params, H)
    assert out.shape == (B, E), f"bad output shape {out.shape}"
    max_err = jnp.max(jnp.abs(out - ref))
    # bf16 MXU operands (f32 accumulation) -> relaxed tolerance vs f32 reference.
    assert jnp.allclose(out, ref, atol=5e-2, rtol=5e-2), (
        f"mismatch vs reference, max abs err {max_err}")
    print("KERNEL_OK")
</pallas_src>

<mosaic_0001>
module attributes {stable_mosaic.version = 11 : i64} {
  func.func @_mha_pool_kernel(%arg0: i32, %arg1: memref<32x4xf32, #tpu.memory_space<vmem>>, %arg2: memref<4x32xf32, #tpu.memory_space<vmem>>, %arg3: memref<32x32xbf16, #tpu.memory_space<vmem>>, %arg4: memref<1x32xf32, #tpu.memory_space<vmem>>, %arg5: memref<32x32xbf16, #tpu.memory_space<vmem>>, %arg6: memref<1x32xf32, #tpu.memory_space<vmem>>, %arg7: memref<32x32xbf16, #tpu.memory_space<vmem>>, %arg8: memref<1x32xf32, #tpu.memory_space<vmem>>, %arg9: memref<2x8x32xf32, #tpu.memory_space<vmem>>, %arg10: memref<2x32xf32, #tpu.memory_space<vmem>>) attributes {dimension_semantics = [#tpu.dimension_semantics<parallel>], iteration_bounds = array<i64: 1>, scalar_prefetch = 0 : i64, scratch_operands = 0 : i64, tpu.core_type = #tpu.core_type<tc>, window_params = [{pipeline_mode = #tpu.pipeline_mode<synchronous>, transform_indices = @transform_0, window_bounds = array<i64: 32, 4>}, {pipeline_mode = #tpu.pipeline_mode<synchronous>, transform_indices = @transform_1, window_bounds = array<i64: 4, 32>}, {pipeline_mode = #tpu.pipeline_mode<synchronous>, transform_indices = @transform_2, window_bounds = array<i64: 32, 32>}, {pipeline_mode = #tpu.pipeline_mode<synchronous>, transform_indices = @transform_3, window_bounds = array<i64: 1, 32>}, {pipeline_mode = #tpu.pipeline_mode<synchronous>, transform_indices = @transform_4, window_bounds = array<i64: 32, 32>}, {pipeline_mode = #tpu.pipeline_mode<synchronous>, transform_indices = @transform_5, window_bounds = array<i64: 1, 32>}, {pipeline_mode = #tpu.pipeline_mode<synchronous>, transform_indices = @transform_6, window_bounds = array<i64: 32, 32>}, {pipeline_mode = #tpu.pipeline_mode<synchronous>, transform_indices = @transform_7, window_bounds = array<i64: 1, 32>}, {transform_indices = @transform_8, window_bounds = array<i64: 2, 8, 32>}, {transform_indices = @transform_9, window_bounds = array<i64: 2, 32>}]} {
    %c0 = arith.constant 0 : index
    %c0_0 = arith.constant 0 : index
    %c0_1 = arith.constant 0 : index
    %0 = vector.load %arg9[%c0, %c0_0, %c0_1] : memref<2x8x32xf32, #tpu.memory_space<vmem>>, vector<2x8x32xf32>
    %1 = vector.shape_cast %0 : vector<2x8x32xf32> to vector<16x32xf32>
    %2 = arith.truncf %1 : vector<16x32xf32> to vector<16x32xbf16>
    %c0_2 = arith.constant 0 : index
    %c0_3 = arith.constant 0 : index
    %3 = vector.load %arg3[%c0_2, %c0_3] : memref<32x32xbf16, #tpu.memory_space<vmem>>, vector<32x32xbf16>
    %cst = arith.constant dense<0.000000e+00> : vector<16x32xf32>
    %4 = tpu.matmul %2, %3, %cst {dimension_numbers = #tpu.dot_dimension_numbers<[1], [0], [0], [1], [0, 0, 1, 1], [], []>} : vector<16x32xbf16>, vector<32x32xbf16>, vector<16x32xf32> -> vector<16x32xf32>
    %c0_4 = arith.constant 0 : index
    %c0_5 = arith.constant 0 : index
    %5 = vector.load %arg4[%c0_4, %c0_5] : memref<1x32xf32, #tpu.memory_space<vmem>>, vector<1x32xf32>
    %6 = vector.broadcast %5 : vector<1x32xf32> to vector<16x32xf32>
    %7 = arith.addf %4, %6 : vector<16x32xf32>
    %c0_6 = arith.constant 0 : index
    %c0_7 = arith.constant 0 : index
    %8 = vector.load %arg5[%c0_6, %c0_7] : memref<32x32xbf16, #tpu.memory_space<vmem>>, vector<32x32xbf16>
    %cst_8 = arith.constant dense<0.000000e+00> : vector<16x32xf32>
    %9 = tpu.matmul %2, %8, %cst_8 {dimension_numbers = #tpu.dot_dimension_numbers<[1], [0], [0], [1], [0, 0, 1, 1], [], []>} : vector<16x32xbf16>, vector<32x32xbf16>, vector<16x32xf32> -> vector<16x32xf32>
    %c0_9 = arith.constant 0 : index
    %c0_10 = arith.constant 0 : index
    %10 = vector.load %arg6[%c0_9, %c0_10] : memref<1x32xf32, #tpu.memory_space<vmem>>, vector<1x32xf32>
    %11 = vector.broadcast %10 : vector<1x32xf32> to vector<16x32xf32>
    %12 = arith.addf %9, %11 : vector<16x32xf32>
    %c0_11 = arith.constant 0 : index
    %c0_12 = arith.constant 0 : index
    %13 = vector.load %arg1[%c0_11, %c0_12] : memref<32x4xf32, #tpu.memory_space<vmem>>, vector<32x4xf32>
    %cst_13 = arith.constant dense<0.000000e+00> : vector<16x4xf32>
    %14 = tpu.matmul %7, %13, %cst_13 {dimension_numbers = #tpu.dot_dimension_numbers<[1], [0], [0], [1], [0, 0, 1, 1], [], []>} : vector<16x32xf32>, vector<32x4xf32>, vector<16x4xf32> -> vector<16x4xf32>
    %c0_14 = arith.constant 0 : index
    %c0_15 = arith.constant 0 : index
    %15 = vector.load %arg2[%c0_14, %c0_15] : memref<4x32xf32, #tpu.memory_space<vmem>>, vector<4x32xf32>
    %16 = vector.extract_strided_slice %14 {offsets = [0, 0], sizes = [8, 4], strides = [1, 1]} : vector<16x4xf32> to vector<8x4xf32>
    %17 = vector.extract_strided_slice %12 {offsets = [0, 0], sizes = [8, 32], strides = [1, 1]} : vector<16x32xf32> to vector<8x32xf32>
    %cst_16 = arith.constant dense<0xFF800000> : vector<4xf32>
    %18 = vector.multi_reduction <maximumf>, %16, %cst_16 [0] : vector<8x4xf32> to vector<4xf32>
    %19 = vector.shape_cast %18 : vector<4xf32> to vector<1x4xf32>
    %20 = vector.broadcast %19 : vector<1x4xf32> to vector<8x4xf32>
    %21 = arith.subf %16, %20 : vector<8x4xf32>
    %22 = math.exp %21 : vector<8x4xf32>
    %cst_17 = arith.constant dense<0.000000e+00> : vector<4xf32>
    %23 = vector.multi_reduction <add>, %22, %cst_17 [0] : vector<8x4xf32> to vector<4xf32>
    %24 = vector.shape_cast %23 : vector<4xf32> to vector<1x4xf32>
    %cst_18 = arith.constant dense<0.000000e+00> : vector<4x32xf32>
    %25 = tpu.matmul %22, %17, %cst_18 {dimension_numbers = #tpu.dot_dimension_numbers<[0], [0], [1], [1], [0, 1, 1, 1], [], []>} : vector<8x4xf32>, vector<8x32xf32>, vector<4x32xf32> -> vector<4x32xf32>
    %cst_19 = arith.constant 1.000000e+00 : f32
    %26 = vector.broadcast %cst_19 : f32 to vector<1x4xf32>
    %27 = arith.divf %26, %24 : vector<1x4xf32>
    %cst_20 = arith.constant dense<0.000000e+00> : vector<1x32xf32>
    %28 = tpu.matmul %27, %15, %cst_20 {dimension_numbers = #tpu.dot_dimension_numbers<[1], [0], [0], [1], [0, 0, 1, 1], [], []>} : vector<1x4xf32>, vector<4x32xf32>, vector<1x32xf32> -> vector<1x32xf32>
    %29 = arith.mulf %15, %25 : vector<4x32xf32>
    %cst_21 = arith.constant dense<0.000000e+00> : vector<32xf32>
    %30 = vector.multi_reduction <add>, %29, %cst_21 [0] : vector<4x32xf32> to vector<32xf32>
    %31 = vector.shape_cast %30 : vector<32xf32> to vector<1x32xf32>
    %32 = arith.mulf %31, %28 : vector<1x32xf32>
    %33 = vector.extract_strided_slice %14 {offsets = [8, 0], sizes = [8, 4], strides = [1, 1]} : vector<16x4xf32> to vector<8x4xf32>
    %34 = vector.extract_strided_slice %12 {offsets = [8, 0], sizes = [8, 32], strides = [1, 1]} : vector<16x32xf32> to vector<8x32xf32>
    %cst_22 = arith.constant dense<0xFF800000> : vector<4xf32>
    %35 = vector.multi_reduction <maximumf>, %33, %cst_22 [0] : vector<8x4xf32> to vector<4xf32>
    %36 = vector.shape_cast %35 : vector<4xf32> to vector<1x4xf32>
    %37 = vector.broadcast %36 : vector<1x4xf32> to vector<8x4xf32>
    %38 = arith.subf %33, %37 : vector<8x4xf32>
    %39 = math.exp %38 : vector<8x4xf32>
    %cst_23 = arith.constant dense<0.000000e+00> : vector<4xf32>
    %40 = vector.multi_reduction <add>, %39, %cst_23 [0] : vector<8x4xf32> to vector<4xf32>
    %41 = vector.shape_cast %40 : vector<4xf32> to vector<1x4xf32>
    %cst_24 = arith.constant dense<0.000000e+00> : vector<4x32xf32>
    %42 = tpu.matmul %39, %34, %cst_24 {dimension_numbers = #tpu.dot_dimension_numbers<[0], [0], [1], [1], [0, 1, 1, 1], [], []>} : vector<8x4xf32>, vector<8x32xf32>, vector<4x32xf32> -> vector<4x32xf32>
    %cst_25 = arith.constant 1.000000e+00 : f32
    %43 = vector.broadcast %cst_25 : f32 to vector<1x4xf32>
    %44 = arith.divf %43, %41 : vector<1x4xf32>
    %cst_26 = arith.constant dense<0.000000e+00> : vector<1x32xf32>
    %45 = tpu.matmul %44, %15, %cst_26 {dimension_numbers = #tpu.dot_dimension_numbers<[1], [0], [0], [1], [0, 0, 1, 1], [], []>} : vector<1x4xf32>, vector<4x32xf32>, vector<1x32xf32> -> vector<1x32xf32>
    %46 = arith.mulf %15, %42 : vector<4x32xf32>
    %cst_27 = arith.constant dense<0.000000e+00> : vector<32xf32>
    %47 = vector.multi_reduction <add>, %46, %cst_27 [0] : vector<4x32xf32> to vector<32xf32>
    %48 = vector.shape_cast %47 : vector<32xf32> to vector<1x32xf32>
    %49 = arith.mulf %48, %45 : vector<1x32xf32>
    %50 = tpu.concatenate %32, %49 in 0 : vector<1x32xf32>, vector<1x32xf32> -> vector<2x32xf32>
    %51 = arith.truncf %50 : vector<2x32xf32> to vector<2x32xbf16>
    %c0_28 = arith.constant 0 : index
    %c0_29 = arith.constant 0 : index
    %52 = vector.load %arg7[%c0_28, %c0_29] : memref<32x32xbf16, #tpu.memory_space<vmem>>, vector<32x32xbf16>
    %cst_30 = arith.constant dense<0.000000e+00> : vector<2x32xf32>
    %53 = tpu.matmul %51, %52, %cst_30 {dimension_numbers = #tpu.dot_dimension_numbers<[1], [0], [0], [1], [0, 0, 1, 1], [], []>} : vector<2x32xbf16>, vector<32x32xbf16>, vector<2x32xf32> -> vector<2x32xf32>
    %c0_31 = arith.constant 0 : index
    %c0_32 = arith.constant 0 : index
    %54 = vector.load %arg8[%c0_31, %c0_32] : memref<1x32xf32, #tpu.memory_space<vmem>>, vector<1x32xf32>
    %55 = vector.broadcast %54 : vector<1x32xf32> to vector<2x32xf32>
    %56 = arith.addf %53, %55 : vector<2x32xf32>
    %c0_33 = arith.constant 0 : index
    %c0_34 = arith.constant 0 : index
    %57 = vector.load %arg10[%c0_33, %c0_34] : memref<2x32xf32, #tpu.memory_space<vmem>>, vector<2x32xf32>
    tpu.vector_store %arg10[%c0_33, %c0_34], %56 {strides = array<i32>} : memref<2x32xf32, #tpu.memory_space<vmem>>, vector<2x32xf32>,
    return
  }
  func.func @transform_0(%arg0: i32) -> (i32, i32) {
    %c0_i32 = arith.constant 0 : i32
    %c0_i32_0 = arith.constant 0 : i32
    %c0_i32_1 = arith.constant 0 : i32
    return %c0_i32, %c0_i32_0 : i32, i32
  }
  func.func @transform_1(%arg0: i32) -> (i32, i32) {
    %c0_i32 = arith.constant 0 : i32
    %c0_i32_0 = arith.constant 0 : i32
    %c0_i32_1 = arith.constant 0 : i32
    return %c0_i32, %c0_i32_0 : i32, i32
  }
  func.func @transform_2(%arg0: i32) -> (i32, i32) {
    %c0_i32 = arith.constant 0 : i32
    %c0_i32_0 = arith.constant 0 : i32
    %c0_i32_1 = arith.constant 0 : i32
    return %c0_i32, %c0_i32_0 : i32, i32
  }
  func.func @transform_3(%arg0: i32) -> (i32, i32) {
    %c0_i32 = arith.constant 0 : i32
    %c0_i32_0 = arith.constant 0 : i32
    %c0_i32_1 = arith.constant 0 : i32
    return %c0_i32, %c0_i32_0 : i32, i32
  }
  func.func @transform_4(%arg0: i32) -> (i32, i32) {
    %c0_i32 = arith.constant 0 : i32
    %c0_i32_0 = arith.constant 0 : i32
    %c0_i32_1 = arith.constant 0 : i32
    return %c0_i32, %c0_i32_0 : i32, i32
  }
  func.func @transform_5(%arg0: i32) -> (i32, i32) {
    %c0_i32 = arith.constant 0 : i32
    %c0_i32_0 = arith.constant 0 : i32
    %c0_i32_1 = arith.constant 0 : i32
    return %c0_i32, %c0_i32_0 : i32, i32
  }
  func.func @transform_6(%arg0: i32) -> (i32, i32) {
    %c0_i32 = arith.constant 0 : i32
    %c0_i32_0 = arith.constant 0 : i32
    %c0_i32_1 = arith.constant 0 : i32
    return %c0_i32, %c0_i32_0 : i32, i32
  }
  func.func @transform_7(%arg0: i32) -> (i32, i32) {
    %c0_i32 = arith.constant 0 : i32
    %c0_i32_0 = arith.constant 0 : i32
    %c0_i32_1 = arith.constant 0 : i32
    return %c0_i32, %c0_i32_0 : i32, i32
  }
  func.func @transform_8(%arg0: i32) -> (i32, i32, i32) {
    %c0_i32 = arith.constant 0 : i32
    %c0_i32_0 = arith.constant 0 : i32
    %c0_i32_1 = arith.constant 0 : i32
    return %arg0, %c0_i32, %c0_i32_0 : i32, i32, i32
  }
  func.func @transform_9(%arg0: i32) -> (i32, i32) {
    %c0_i32 = arith.constant 0 : i32
    %c0_i32_0 = arith.constant 0 : i32
    return %arg0, %c0_i32 : i32, i32
  }
}

</mosaic_0001>

<llo_original>
// kernel: multihead_attention_pooling.1
$region0: #{multihead_attention_pooling.1}
  #allocation0 [shape = 'u32[]', space=smem, size = 0x4, offset = 0x4, fixed_abs, tag = 'smem constant byte address 0x4 - core index']
  #allocation1 [shape = 'u32[144,128]{1,0:T(1,128)}', space=vmem, size = 0x12000, scoped, tag = 'internal scratch']
  %s0 = inlined_call_operand.vmem [shape: f32[32,4], index: 0, kind: input, shape index: {}]
  %s1 = inlined_call_operand.vmem [shape: f32[4,32], index: 1, kind: input, shape index: {}]
  %s2 = inlined_call_operand.vmem [shape: bf16[32,32], index: 2, kind: input, shape index: {}]
  %s3 = inlined_call_operand.vmem [shape: f32[1,32], index: 3, kind: input, shape index: {}]
  %s4 = inlined_call_operand.vmem [shape: bf16[32,32], index: 4, kind: input, shape index: {}]
  %s5 = inlined_call_operand.vmem [shape: f32[1,32], index: 5, kind: input, shape index: {}]
  %s6 = inlined_call_operand.vmem [shape: bf16[32,32], index: 6, kind: input, shape index: {}]
  %s7 = inlined_call_operand.vmem [shape: f32[1,32], index: 7, kind: input, shape index: {}]
  %s8 = inlined_call_operand.vmem [shape: f32[2,8,32], index: 8, kind: input, shape index: {}]
  %s9 = inlined_call_operand.hbm [shape: f32[2,32], index: 9, kind: output, shape index: {}]
  %s10 = sld [smem:[#allocation0]]
  $region46: #{multihead_attention_pooling.1} parent=0
    _
  %s12 = ssub.s32 1, %s10
  %s13 = scalar_select 0, %s12, %s10
  $region1: #{multihead_attention_pooling.1} parent=0
    #allocation2 [shape = 'u8[1024]{0}', space=vmem, size = 0x400, scoped, tag = 'output window, operand 0, single buffered']
    #allocation3 [shape = 's32[1]{0}', space=sflag, size = 0x4, scoped, tag = 'scoped memory for multihead_attention_pooling.1']
    %14 = vsyncpa [#allocation3], 0
    // Predicated region
    $region2: #{multihead_attention_pooling.1} parent=1 // pred_check
      _
    $region3: #{multihead_attention_pooling.1} parent=1 // pred_check_branch
      %16 = sbr.rel (0) target = $region5
    $region4: #{multihead_attention_pooling.1} parent=1 // pred_region
      _
    $region5: #{multihead_attention_pooling.1} parent=1 // pred_fallthru
      _
    // Predicated region
    $region6: #{multihead_attention_pooling.1} parent=1 // pred_check
      _
    $region7: #{multihead_attention_pooling.1} parent=1 // pred_check_branch
      %18 = sbr.rel (0) target = $region9
    $region8: #{multihead_attention_pooling.1} parent=1 // pred_region
      _
    $region9: #{multihead_attention_pooling.1} parent=1 // pred_fallthru
      _
    // Predicated region
    $region10: #{multihead_attention_pooling.1} parent=1 // pred_check
      _
    $region11: #{multihead_attention_pooling.1} parent=1 // pred_check_branch
      %20 = sbr.rel (0) target = $region13
    $region12: #{multihead_attention_pooling.1} parent=1 // pred_region
      _
    $region13: #{multihead_attention_pooling.1} parent=1 // pred_fallthru
      _
    // Predicated region
    $region14: #{multihead_attention_pooling.1} parent=1 // pred_check
      _
    $region15: #{multihead_attention_pooling.1} parent=1 // pred_check_branch
      %22 = sbr.rel (0) target = $region17
    $region16: #{multihead_attention_pooling.1} parent=1 // pred_region
      _
    $region17: #{multihead_attention_pooling.1} parent=1 // pred_fallthru
      _
    // Predicated region
    $region18: #{multihead_attention_pooling.1} parent=1 // pred_check
      _
    $region19: #{multihead_attention_pooling.1} parent=1 // pred_check_branch
      %24 = sbr.rel (0) target = $region21
    $region20: #{multihead_attention_pooling.1} parent=1 // pred_region
      _
    $region21: #{multihead_attention_pooling.1} parent=1 // pred_fallthru
      _
    // Predicated region
    $region22: #{multihead_attention_pooling.1} parent=1 // pred_check
      _
    $region23: #{multihead_attention_pooling.1} parent=1 // pred_check_branch
      %26 = sbr.rel (0) target = $region25
    $region24: #{multihead_attention_pooling.1} parent=1 // pred_region
      _
    $region25: #{multihead_attention_pooling.1} parent=1 // pred_fallthru
      _
    // Predicated region
    $region26: #{multihead_attention_pooling.1} parent=1 // pred_check
      _
    $region27: #{multihead_attention_pooling.1} parent=1 // pred_check_branch
      %28 = sbr.rel (0) target = $region29
    $region28: #{multihead_attention_pooling.1} parent=1 // pred_region
      _
    $region29: #{multihead_attention_pooling.1} parent=1 // pred_fallthru
      _
    // Predicated region
    $region30: #{multihead_attention_pooling.1} parent=1 // pred_check
      _
    $region31: #{multihead_attention_pooling.1} parent=1 // pred_check_branch
      %30 = sbr.rel (0) target = $region33
    $region32: #{multihead_attention_pooling.1} parent=1 // pred_region
      _
    $region33: #{multihead_attention_pooling.1} parent=1 // pred_fallthru
      _
    // Predicated region
    $region34: #{multihead_attention_pooling.1} parent=1 // pred_check
      _
    $region35: #{multihead_attention_pooling.1} parent=1 // pred_check_branch
      %32 = sbr.rel (0) target = $region37
    $region36: #{multihead_attention_pooling.1} parent=1 // pred_region
      _
    $region37: #{multihead_attention_pooling.1} parent=1 // pred_fallthru
      _
    %v34 = vld [vmem:[%s8] sm:$0xff]
    %v35 = vld [vmem:[%s8 + $0x8] sm:$0xff]
    %v36 = vpack.c.bf16 %v35, %v34
    %v37 = vld [vmem:[%s2] sm:$0xf]
    %v38 = vld [vmem:[%s2 + $0x4] sm:$0xf]
    %v39 = vld [vmem:[%s2 + $0x8] sm:$0xf]
    %v40 = vld [vmem:[%s2 + $0xc] sm:$0xf]
    %v41 = vld [vmem:[%s3] sm:$0x1]
    %v43 = vlaneseq
    %v44 = vshrl.u32 %v43, 7
    %v45 = vsub.s32 0, %v44
    %v46 = vrot.slane %v41, %v45
    %v52 = vunpack.c.l.b16 %v37
    %v53 = vunpack.c.l.b16 %v38
    %v54 = vunpack.c.l.b16 %v39
    %v55 = vunpack.c.l.b16 %v40
    %v56 = vpack.c.b16 %v53, %v52
    %v57 = vpack.c.b16 %v55, %v54
    %vm60 = vcmask 261120
    %v62 = vsel %vm60, %v36, 0
    %64 = vmatprep.subr.bf16.mxu0 0
    %65 = vmatpush1.bf16.msra.mxu0 0
    %66 = vmatprep.subr.bf16.mxu0 0
    %67 = vmatpush1.bf16.msra.mxu0 0
    %68 = vmatprep.subr.bf16.mxu0 0
    %69 = vmatpush1.bf16.msra.mxu0 0
    %70 = vmatprep.subr.bf16.mxu0 0
    %71 = vmatpush1.bf16.msra.mxu0 0
    %72 = vmatprep.subr.bf16.mxu0 0
    %73 = vmatpush1.bf16.msra.mxu0 0
    %74 = vmatprep.subr.bf16.mxu0 0
    %75 = vmatpush1.bf16.msra.mxu0 0
    %76 = vmatprep.subr.bf16.mxu0 0
    %77 = vmatpush1.bf16.msra.mxu0 %v57
    %78 = vmatprep.subr.bf16.mxu0 0
    %79 = vmatpush1.bf16.msra.mxu0 %v56
    %80 = vmatprep.subr.bf16.mxu0 0
    %81 = vmatpush2.bf16.msra.mxu0 0
    %82 = vmatprep.subr.bf16.mxu0 0
    %83 = vmatpush2.bf16.msra.mxu0 0
    %84 = vmatprep.subr.bf16.mxu0 0
    %85 = vmatpush2.bf16.msra.mxu0 0
    %86 = vmatprep.subr.bf16.mxu0 0
    %87 = vmatpush2.bf16.msra.mxu0 0
    %88 = vmatprep.subr.bf16.mxu0 0
    %89 = vmatpush2.bf16.msra.mxu0 0
    %90 = vmatprep.subr.bf16.mxu0 0
    %91 = vmatpush2.bf16.msra.mxu0 0
    %92 = vmatprep.subr.bf16.mxu0 0
    %93 = vmatpush2.bf16.msra.mxu0 0
    %94 = vmatprep.subr.bf16.mxu0 0
    %95 = vmatpush2.bf16.msra.mxu0 0
    %96 = vmatprep.mubr.bf16.mxu0 0
    %97 = vmatmul.mubr.bf16.gmra.mxu0 %v62
    %v98 = vpop.f32.mrf.mxu0
    %v99 = vadd.f32 %v46, %v98
    %v100 = vpop.f32.mrf.mxu0
    %v101 = vpop.f32.mrf.mxu0
    %v102 = vadd.f32 %v46, %v101
    %v103 = vpop.f32.mrf.mxu0
    %104 = vdwg.mxu0
    %v105 = vld [vmem:[%s4] sm:$0xf]
    %v106 = vld [vmem:[%s4 + $0x4] sm:$0xf]
    %v107 = vld [vmem:[%s4 + $0x8] sm:$0xf]
    %v108 = vld [vmem:[%s4 + $0xc] sm:$0xf]
    %v109 = vld [vmem:[%s5] sm:$0x1]
    %v111 = vlaneseq
    %v112 = vshrl.u32 %v111, 7
    %v113 = vsub.s32 0, %v112
    %v114 = vrot.slane %v109, %v113
    %v120 = vunpack.c.l.b16 %v105
    %v121 = vunpack.c.l.b16 %v106
    %v122 = vunpack.c.l.b16 %v107
    %v123 = vunpack.c.l.b16 %v108
    %v124 = vpack.c.b16 %v121, %v120
    %v125 = vpack.c.b16 %v123, %v122
    %128 = vmatprep.subr.bf16.mxu0 0
    %129 = vmatpush1.bf16.msra.mxu0 0
    %130 = vmatprep.subr.bf16.mxu0 0
    %131 = vmatpush1.bf16.msra.mxu0 0
    %132 = vmatprep.subr.bf16.mxu0 0
    %133 = vmatpush1.bf16.msra.mxu0 0
    %134 = vmatprep.subr.bf16.mxu0 0
    %135 = vmatpush1.bf16.msra.mxu0 0
    %136 = vmatprep.subr.bf16.mxu0 0
    %137 = vmatpush1.bf16.msra.mxu0 0
    %138 = vmatprep.subr.bf16.mxu0 0
    %139 = vmatpush1.bf16.msra.mxu0 0
    %140 = vmatprep.subr.bf16.mxu0 0
    %141 = vmatpush1.bf16.msra.mxu0 %v125
    %142 = vmatprep.subr.bf16.mxu0 0
    %143 = vmatpush1.bf16.msra.mxu0 %v124
    %144 = vmatprep.subr.bf16.mxu0 0
    %145 = vmatpush2.bf16.msra.mxu0 0
    %146 = vmatprep.subr.bf16.mxu0 0
    %147 = vmatpush2.bf16.msra.mxu0 0
    %148 = vmatprep.subr.bf16.mxu0 0
    %149 = vmatpush2.bf16.msra.mxu0 0
    %150 = vmatprep.subr.bf16.mxu0 0
    %151 = vmatpush2.bf16.msra.mxu0 0
    %152 = vmatprep.subr.bf16.mxu0 0
    %153 = vmatpush2.bf16.msra.mxu0 0
    %154 = vmatprep.subr.bf16.mxu0 0
    %155 = vmatpush2.bf16.msra.mxu0 0
    %156 = vmatprep.subr.bf16.mxu0 0
    %157 = vmatpush2.bf16.msra.mxu0 0
    %158 = vmatprep.subr.bf16.mxu0 0
    %159 = vmatpush2.bf16.msra.mxu0 0
    %160 = vmatprep.mubr.bf16.mxu0 0
    %161 = vmatmul.mubr.bf16.gmra.mxu0 %v62
    %v162 = vpop.f32.mrf.mxu0
    %v163 = vadd.f32 %v114, %v162
    %v164 = vpop.f32.mrf.mxu0
    %v165 = vpop.f32.mrf.mxu0
    %v166 = vadd.f32 %v114, %v165
    %v167 = vpop.f32.mrf.mxu0
    %168 = vdwg.mxu0
    %v169 = vld [vmem:[%s0] sm:$0xff]
    %v170 = vld [vmem:[%s0 + $0x8] sm:$0xff]
    %v171 = vld [vmem:[%s0 + $0x10] sm:$0xff]
    %v172 = vld [vmem:[%s0 + $0x18] sm:$0xff]
    %v174 = vsel %vm60, %v99, 0
    %v177 = vsel %vm60, %v102, 0
    %179 = vmatprep.subr.mxu0 0.0
    %180 = vmatpush1.msra.mxu0 0.0
    %181 = vmatprep.subr.mxu0 0.0
    %182 = vmatpush1.msra.mxu0 0.0
    %183 = vmatprep.subr.mxu0 0.0
    %184 = vmatpush1.msra.mxu0 0.0
    %185 = vmatprep.subr.mxu0 0.0
    %186 = vmatpush1.msra.mxu0 0.0
    %187 = vmatprep.subr.mxu0 0.0
    %188 = vmatpush1.msra.mxu0 0.0
    %189 = vmatprep.subr.mxu0 0.0
    %190 = vmatpush1.msra.mxu0 0.0
    %191 = vmatprep.subr.mxu0 0.0
    %192 = vmatpush1.msra.mxu0 0.0
    %193 = vmatprep.subr.mxu0 0.0
    %194 = vmatpush1.msra.mxu0 0.0
    %195 = vmatprep.subr.mxu0 0.0
    %196 = vmatpush1.msra.mxu0 0.0
    %197 = vmatprep.subr.mxu0 0.0
    %198 = vmatpush1.msra.mxu0 0.0
    %199 = vmatprep.subr.mxu0 0.0
    %200 = vmatpush1.msra.mxu0 0.0
    %201 = vmatprep.subr.mxu0 0.0
    %202 = vmatpush1.msra.mxu0 0.0
    %203 = vmatprep.subr.mxu0 0.0
    %204 = vmatpush1.msra.mxu0 %v172
    %205 = vmatprep.subr.mxu0 0.0
    %206 = vmatpush1.msra.mxu0 %v171
    %207 = vmatprep.subr.mxu0 0.0
    %208 = vmatpush1.msra.mxu0 %v170
    %209 = vmatprep.subr.mxu0 0.0
    %210 = vmatpush1.msra.mxu0 %v169
    %211 = vmatprep.subr.mxu0 0.0
    %212 = vmatpush2.msra.mxu0 0.0
    %213 = vmatprep.subr.mxu0 0.0
    %214 = vmatpush2.msra.mxu0 0.0
    %215 = vmatprep.subr.mxu0 0.0
    %216 = vmatpush2.msra.mxu0 0.0
    %217 = vmatprep.subr.mxu0 0.0
    %218 = vmatpush2.msra.mxu0 0.0
    %219 = vmatprep.subr.mxu0 0.0
    %220 = vmatpush2.msra.mxu0 0.0
    %221 = vmatprep.subr.mxu0 0.0
    %222 = vmatpush2.msra.mxu0 0.0
    %223 = vmatprep.subr.mxu0 0.0
    %224 = vmatpush2.msra.mxu0 0.0
    %225 = vmatprep.subr.mxu0 0.0
    %226 = vmatpush2.msra.mxu0 0.0
    %227 = vmatprep.subr.mxu0 0.0
    %228 = vmatpush2.msra.mxu0 0.0
    %229 = vmatprep.subr.mxu0 0.0
    %230 = vmatpush2.msra.mxu0 0.0
    %231 = vmatprep.subr.mxu0 0.0
    %232 = vmatpush2.msra.mxu0 0.0
    %233 = vmatprep.subr.mxu0 0.0
    %234 = vmatpush2.msra.mxu0 0.0
    %235 = vmatprep.subr.mxu0 0.0
    %236 = vmatpush2.msra.mxu0 0.0
    %237 = vmatprep.subr.mxu0 0.0
    %238 = vmatpush2.msra.mxu0 0.0
    %239 = vmatprep.subr.mxu0 0.0
    %240 = vmatpush2.msra.mxu0 0.0
    %241 = vmatprep.subr.mxu0 0.0
    %242 = vmatpush2.msra.mxu0 0.0
    %243 = vmatprep.mubr.f32.mxu0 0.0
    %244 = vmatmul.mubr.f32.gmra.mxu0 %v174
    %v245 = vpop.f32.mrf.mxu0
    %v246 = vadd.f32 0.0, %v245
    %v247 = vpop.f32.mrf.mxu0
    %248 = vmatprep.mubr.f32.mxu0 0.0
    %249 = vmatmul.mubr.f32.gmra.mxu0 %v177
    %v250 = vpop.f32.mrf.mxu0
    %v251 = vadd.f32 0.0, %v250
    %v252 = vpop.f32.mrf.mxu0
    %253 = vdwg.mxu0
    %v254 = vld [vmem:[%s1] sm:$0xf]
    %vm255 = vcmask 31744
    %v256 = vsel %vm255, %v246, -inf
    %v257 = vrot.slane %v256, 4
    %v258 = vmax.f32 %v256, %v257
    %v259 = vrot.slane %v258, 2
    %v260 = vmax.f32 %v258, %v259
    %v261 = vrot.slane %v260, 1
    %v262 = vmax.f32 %v260, %v261
    %v263 = vsub.f32 %v246, %v262
    %v264 = vmul.f32 %v263, 1.442695
    %v265 = vpow.pop %v264
    %v266 = vsel %vm255, %v265, 0.0
    %v267 = vrot.slane %v266, 4
    %v268 = vadd.f32 %v266, %v267
    %v269 = vrot.slane %v268, 2
    %v270 = vadd.f32 %v268, %v269
    %v271 = vrot.slane %v270, 1
    %v272 = vadd.f32 %v270, %v271
    %273 = vxpose.xlu0.b32.start [1/16] %v265, 128
    %274 = vxpose.xlu0.b32.cont [2/16] 0.0, 128
    %275 = vxpose.xlu0.b32.cont [3/16] 0.0, 128
    %276 = vxpose.xlu0.b32.cont [4/16] 0.0, 128
    %277 = vxpose.xlu0.b32.cont [5/16] 0.0, 128
    %278 = vxpose.xlu0.b32.cont [6/16] 0.0, 128
    %279 = vxpose.xlu0.b32.cont [7/16] 0.0, 128
    %280 = vxpose.xlu0.b32.cont [8/16] 0.0, 128
    %281 = vxpose.xlu0.b32.cont [9/16] 0.0, 128
    %282 = vxpose.xlu0.b32.cont [10/16] 0.0, 128
    %283 = vxpose.xlu0.b32.cont [11/16] 0.0, 128
    %284 = vxpose.xlu0.b32.cont [12/16] 0.0, 128
    %285 = vxpose.xlu0.b32.cont [13/16] 0.0, 128
    %286 = vxpose.xlu0.b32.cont [14/16] 0.0, 128
    %287 = vxpose.xlu0.b32.cont [15/16] 0.0, 128
    %288 = vxpose.xlu0.b32.end [16/16] 0.0, 128
    %v289 = vpop.trf.xlu0
    %v290 = vpop.trf.xlu0
    %v291 = vpop.trf.xlu0
    %v292 = vpop.trf.xlu0
    %v293 = vpop.trf.xlu0
    %v294 = vpop.trf.xlu0
    %v295 = vpop.trf.xlu0
    %v296 = vpop.trf.xlu0
    %v297 = vpop.trf.xlu0
    %v298 = vpop.trf.xlu0
    %v299 = vpop.trf.xlu0
    %v300 = vpop.trf.xlu0
    %v301 = vpop.trf.xlu0
    %v302 = vpop.trf.xlu0
    %v303 = vpop.trf.xlu0
    %v304 = vpop.trf.xlu0
    %vm305 = vcmask 64512
    %v307 = vsel %vm305, %v289, 0
    %309 = vmatprep.subr.mxu0 0.0
    %310 = vmatpush1.msra.mxu0 0.0
    %311 = vmatprep.subr.mxu0 0.0
    %312 = vmatpush1.msra.mxu0 0.0
    %313 = vmatprep.subr.mxu0 0.0
    %314 = vmatpush1.msra.mxu0 0.0
    %315 = vmatprep.subr.mxu0 0.0
    %316 = vmatpush1.msra.mxu0 0.0
    %317 = vmatprep.subr.mxu0 0.0
    %318 = vmatpush1.msra.mxu0 0.0
    %319 = vmatprep.subr.mxu0 0.0
    %320 = vmatpush1.msra.mxu0 0.0
    %321 = vmatprep.subr.mxu0 0.0
    %322 = vmatpush1.msra.mxu0 0.0
    %323 = vmatprep.subr.mxu0 0.0
    %324 = vmatpush1.msra.mxu0 0.0
    %325 = vmatprep.subr.mxu0 0.0
    %326 = vmatpush1.msra.mxu0 0.0
    %327 = vmatprep.subr.mxu0 0.0
    %328 = vmatpush1.msra.mxu0 0.0
    %329 = vmatprep.subr.mxu0 0.0
    %330 = vmatpush1.msra.mxu0 0.0
    %331 = vmatprep.subr.mxu0 0.0
    %332 = vmatpush1.msra.mxu0 0.0
    %333 = vmatprep.subr.mxu0 0.0
    %334 = vmatpush1.msra.mxu0 0.0
    %335 = vmatprep.subr.mxu0 0.0
    %336 = vmatpush1.msra.mxu0 0.0
    %337 = vmatprep.subr.mxu0 0.0
    %338 = vmatpush1.msra.mxu0 0.0
    %339 = vmatprep.subr.mxu0 0.0
    %340 = vmatpush1.msra.mxu0 %v163
    %341 = vmatprep.subr.mxu0 0.0
    %342 = vmatpush2.msra.mxu0 0.0
    %343 = vmatprep.subr.mxu0 0.0
    %344 = vmatpush2.msra.mxu0 0.0
    %345 = vmatprep.subr.mxu0 0.0
    %346 = vmatpush2.msra.mxu0 0.0
    %347 = vmatprep.subr.mxu0 0.0
    %348 = vmatpush2.msra.mxu0 0.0
    %349 = vmatprep.subr.mxu0 0.0
    %350 = vmatpush2.msra.mxu0 0.0
    %351 = vmatprep.subr.mxu0 0.0
    %352 = vmatpush2.msra.mxu0 0.0
    %353 = vmatprep.subr.mxu0 0.0
    %354 = vmatpush2.msra.mxu0 0.0
    %355 = vmatprep.subr.mxu0 0.0
    %356 = vmatpush2.msra.mxu0 0.0
    %357 = vmatprep.subr.mxu0 0.0
    %358 = vmatpush2.msra.mxu0 0.0
    %359 = vmatprep.subr.mxu0 0.0
    %360 = vmatpush2.msra.mxu0 0.0
    %361 = vmatprep.subr.mxu0 0.0
    %362 = vmatpush2.msra.mxu0 0.0
    %363 = vmatprep.subr.mxu0 0.0
    %364 = vmatpush2.msra.mxu0 0.0
    %365 = vmatprep.subr.mxu0 0.0
    %366 = vmatpush2.msra.mxu0 0.0
    %367 = vmatprep.subr.mxu0 0.0
    %368 = vmatpush2.msra.mxu0 0.0
    %369 = vmatprep.subr.mxu0 0.0
    %370 = vmatpush2.msra.mxu0 0.0
    %371 = vmatprep.subr.mxu0 0.0
    %372 = vmatpush2.msra.mxu0 0.0
    %373 = vmatprep.mubr.f32.mxu0 0.0
    %374 = vmatmul.mubr.f32.gmra.mxu0 %v307
    %v375 = vpop.f32.mrf.mxu0
    %v376 = vadd.f32 0.0, %v375
    %v377 = vpop.f32.mrf.mxu0
    %378 = vdwg.mxu0
    %v379 = vrcp.pop %v272
    %v380 = vmul.f32 1.0, %v379
    %v382 = vsel %vm255, %v380, 0
    %vm384 = vcmask 1043456
    %v386 = vsel %vm384, %v254, 0
    %388 = vmatprep.subr.mxu0 0.0
    %389 = vmatpush1.msra.mxu0 0.0
    %390 = vmatprep.subr.mxu0 0.0
    %391 = vmatpush1.msra.mxu0 0.0
    %392 = vmatprep.subr.mxu0 0.0
    %393 = vmatpush1.msra.mxu0 0.0
    %394 = vmatprep.subr.mxu0 0.0
    %395 = vmatpush1.msra.mxu0 0.0
    %396 = vmatprep.subr.mxu0 0.0
    %397 = vmatpush1.msra.mxu0 0.0
    %398 = vmatprep.subr.mxu0 0.0
    %399 = vmatpush1.msra.mxu0 0.0
    %400 = vmatprep.subr.mxu0 0.0
    %401 = vmatpush1.msra.mxu0 0.0
    %402 = vmatprep.subr.mxu0 0.0
    %403 = vmatpush1.msra.mxu0 0.0
    %404 = vmatprep.subr.mxu0 0.0
    %405 = vmatpush1.msra.mxu0 0.0
    %406 = vmatprep.subr.mxu0 0.0
    %407 = vmatpush1.msra.mxu0 0.0
    %408 = vmatprep.subr.mxu0 0.0
    %409 = vmatpush1.msra.mxu0 0.0
    %410 = vmatprep.subr.mxu0 0.0
    %411 = vmatpush1.msra.mxu0 0.0
    %412 = vmatprep.subr.mxu0 0.0
    %413 = vmatpush1.msra.mxu0 0.0
    %414 = vmatprep.subr.mxu0 0.0
    %415 = vmatpush1.msra.mxu0 0.0
    %416 = vmatprep.subr.mxu0 0.0
    %417 = vmatpush1.msra.mxu0 0.0
    %418 = vmatprep.subr.mxu0 0.0
    %419 = vmatpush1.msra.mxu0 %v386
    %420 = vmatprep.subr.mxu0 0.0
    %421 = vmatpush2.msra.mxu0 0.0
    %422 = vmatprep.subr.mxu0 0.0
    %423 = vmatpush2.msra.mxu0 0.0
    %424 = vmatprep.subr.mxu0 0.0
    %425 = vmatpush2.msra.mxu0 0.0
    %426 = vmatprep.subr.mxu0 0.0
    %427 = vmatpush2.msra.mxu0 0.0
    %428 = vmatprep.subr.mxu0 0.0
    %429 = vmatpush2.msra.mxu0 0.0
    %430 = vmatprep.subr.mxu0 0.0
    %431 = vmatpush2.msra.mxu0 0.0
    %432 = vmatprep.subr.mxu0 0.0
    %433 = vmatpush2.msra.mxu0 0.0
    %434 = vmatprep.subr.mxu0 0.0
    %435 = vmatpush2.msra.mxu0 0.0
    %436 = vmatprep.subr.mxu0 0.0
    %437 = vmatpush2.msra.mxu0 0.0
    %438 = vmatprep.subr.mxu0 0.0
    %439 = vmatpush2.msra.mxu0 0.0
    %440 = vmatprep.subr.mxu0 0.0
    %441 = vmatpush2.msra.mxu0 0.0
    %442 = vmatprep.subr.mxu0 0.0
    %443 = vmatpush2.msra.mxu0 0.0
    %444 = vmatprep.subr.mxu0 0.0
    %445 = vmatpush2.msra.mxu0 0.0
    %446 = vmatprep.subr.mxu0 0.0
    %447 = vmatpush2.msra.mxu0 0.0
    %448 = vmatprep.subr.mxu0 0.0
    %449 = vmatpush2.msra.mxu0 0.0
    %450 = vmatprep.subr.mxu0 0.0
    %451 = vmatpush2.msra.mxu0 0.0
    %452 = vmatprep.mubr.f32.mxu0 0.0
    %453 = vmatmul.mubr.f32.gmra.mxu0 %v382
    %v454 = vpop.f32.mrf.mxu0
    %v455 = vadd.f32 0.0, %v454
    %v456 = vpop.f32.mrf.mxu0
    %457 = vdwg.mxu0
    %v458 = vmul.f32 %v254, %v376
    %vm459 = vcmask 257024
    %v460 = vsel %vm459, %v458, 0.0
    %v461 = vrot.slane %v460, 4
    %v462 = vadd.f32 %v460, %v461
    %v463 = vrot.slane %v462, 2
    %v464 = vadd.f32 %v462, %v463
    %v465 = vrot.slane %v464, 1
    %v466 = vadd.f32 %v464, %v465
    %v467 = vmul.f32 %v466, %v455
    %v468 = vsel %vm255, %v251, -inf
    %v469 = vrot.slane %v468, 4
    %v470 = vmax.f32 %v468, %v469
    %v471 = vrot.slane %v470, 2
    %v472 = vmax.f32 %v470, %v471
    %v473 = vrot.slane %v472, 1
    %v474 = vmax.f32 %v472, %v473
    %v475 = vsub.f32 %v251, %v474
    %v476 = vmul.f32 %v475, 1.442695
    %v477 = vpow.pop %v476
    %v478 = vsel %vm255, %v477, 0.0
    %v479 = vrot.slane %v478, 4
    %v480 = vadd.f32 %v478, %v479
    %v481 = vrot.slane %v480, 2
    %v482 = vadd.f32 %v480, %v481
    %v483 = vrot.slane %v482, 1
    %v484 = vadd.f32 %v482, %v483
    %485 = vxpose.xlu0.b32.start [1/16] %v477, 128
    %486 = vxpose.xlu0.b32.cont [2/16] 0.0, 128
    %487 = vxpose.xlu0.b32.cont [3/16] 0.0, 128
    %488 = vxpose.xlu0.b32.cont [4/16] 0.0, 128
    %489 = vxpose.xlu0.b32.cont [5/16] 0.0, 128
    %490 = vxpose.xlu0.b32.cont [6/16] 0.0, 128
    %491 = vxpose.xlu0.b32.cont [7/16] 0.0, 128
    %492 = vxpose.xlu0.b32.cont [8/16] 0.0, 128
    %493 = vxpose.xlu0.b32.cont [9/16] 0.0, 128
    %494 = vxpose.xlu0.b32.cont [10/16] 0.0, 128
    %495 = vxpose.xlu0.b32.cont [11/16] 0.0, 128
    %496 = vxpose.xlu0.b32.cont [12/16] 0.0, 128
    %497 = vxpose.xlu0.b32.cont [13/16] 0.0, 128
    %498 = vxpose.xlu0.b32.cont [14/16] 0.0, 128
    %499 = vxpose.xlu0.b32.cont [15/16] 0.0, 128
    %500 = vxpose.xlu0.b32.end [16/16] 0.0, 128
    %v501 = vpop.trf.xlu0
    %v502 = vpop.trf.xlu0
    %v503 = vpop.trf.xlu0
    %v504 = vpop.trf.xlu0
    %v505 = vpop.trf.xlu0
    %v506 = vpop.trf.xlu0
    %v507 = vpop.trf.xlu0
    %v508 = vpop.trf.xlu0
    %v509 = vpop.trf.xlu0
    %v510 = vpop.trf.xlu0
    %v511 = vpop.trf.xlu0
    %v512 = vpop.trf.xlu0
    %v513 = vpop.trf.xlu0
    %v514 = vpop.trf.xlu0
    %v515 = vpop.trf.xlu0
    %v516 = vpop.trf.xlu0
    %v518 = vsel %vm305, %v501, 0
    %520 = vmatprep.subr.mxu0 0.0
    %521 = vmatpush1.msra.mxu0 0.0
    %522 = vmatprep.subr.mxu0 0.0
    %523 = vmatpush1.msra.mxu0 0.0
    %524 = vmatprep.subr.mxu0 0.0
    %525 = vmatpush1.msra.mxu0 0.0
    %526 = vmatprep.subr.mxu0 0.0
    %527 = vmatpush1.msra.mxu0 0.0
    %528 = vmatprep.subr.mxu0 0.0
    %529 = vmatpush1.msra.mxu0 0.0
    %530 = vmatprep.subr.mxu0 0.0
    %531 = vmatpush1.msra.mxu0 0.0
    %532 = vmatprep.subr.mxu0 0.0
    %533 = vmatpush1.msra.mxu0 0.0
    %534 = vmatprep.subr.mxu0 0.0
    %535 = vmatpush1.msra.mxu0 0.0
    %536 = vmatprep.subr.mxu0 0.0
    %537 = vmatpush1.msra.mxu0 0.0
    %538 = vmatprep.subr.mxu0 0.0
    %539 = vmatpush1.msra.mxu0 0.0
    %540 = vmatprep.subr.mxu0 0.0
    %541 = vmatpush1.msra.mxu0 0.0
    %542 = vmatprep.subr.mxu0 0.0
    %543 = vmatpush1.msra.mxu0 0.0
    %544 = vmatprep.subr.mxu0 0.0
    %545 = vmatpush1.msra.mxu0 0.0
    %546 = vmatprep.subr.mxu0 0.0
    %547 = vmatpush1.msra.mxu0 0.0
    %548 = vmatprep.subr.mxu0 0.0
    %549 = vmatpush1.msra.mxu0 0.0
    %550 = vmatprep.subr.mxu0 0.0
    %551 = vmatpush1.msra.mxu0 %v166
    %552 = vmatprep.subr.mxu0 0.0
    %553 = vmatpush2.msra.mxu0 0.0
    %554 = vmatprep.subr.mxu0 0.0
    %555 = vmatpush2.msra.mxu0 0.0
    %556 = vmatprep.subr.mxu0 0.0
    %557 = vmatpush2.msra.mxu0 0.0
    %558 = vmatprep.subr.mxu0 0.0
    %559 = vmatpush2.msra.mxu0 0.0
    %560 = vmatprep.subr.mxu0 0.0
    %561 = vmatpush2.msra.mxu0 0.0
    %562 = vmatprep.subr.mxu0 0.0
    %563 = vmatpush2.msra.mxu0 0.0
    %564 = vmatprep.subr.mxu0 0.0
    %565 = vmatpush2.msra.mxu0 0.0
    %566 = vmatprep.subr.mxu0 0.0
    %567 = vmatpush2.msra.mxu0 0.0
    %568 = vmatprep.subr.mxu0 0.0
    %569 = vmatpush2.msra.mxu0 0.0
    %570 = vmatprep.subr.mxu0 0.0
    %571 = vmatpush2.msra.mxu0 0.0
    %572 = vmatprep.subr.mxu0 0.0
    %573 = vmatpush2.msra.mxu0 0.0
    %574 = vmatprep.subr.mxu0 0.0
    %575 = vmatpush2.msra.mxu0 0.0
    %576 = vmatprep.subr.mxu0 0.0
    %577 = vmatpush2.msra.mxu0 0.0
    %578 = vmatprep.subr.mxu0 0.0
    %579 = vmatpush2.msra.mxu0 0.0
    %580 = vmatprep.subr.mxu0 0.0
    %581 = vmatpush2.msra.mxu0 0.0
    %582 = vmatprep.subr.mxu0 0.0
    %583 = vmatpush2.msra.mxu0 0.0
    %584 = vmatprep.mubr.f32.mxu0 0.0
    %585 = vmatmul.mubr.f32.gmra.mxu0 %v518
    %v586 = vpop.f32.mrf.mxu0
    %v587 = vadd.f32 0.0, %v586
    %v588 = vpop.f32.mrf.mxu0
    %589 = vdwg.mxu0
    %v590 = vrcp.pop %v484
    %v591 = vmul.f32 1.0, %v590
    %v593 = vsel %vm255, %v591, 0
    %595 = vmatprep.subr.mxu0 0.0
    %596 = vmatpush1.msra.mxu0 0.0
    %597 = vmatprep.subr.mxu0 0.0
    %598 = vmatpush1.msra.mxu0 0.0
    %599 = vmatprep.subr.mxu0 0.0
    %600 = vmatpush1.msra.mxu0 0.0
    %601 = vmatprep.subr.mxu0 0.0
    %602 = vmatpush1.msra.mxu0 0.0
    %603 = vmatprep.subr.mxu0 0.0
    %604 = vmatpush1.msra.mxu0 0.0
    %605 = vmatprep.subr.mxu0 0.0
    %606 = vmatpush1.msra.mxu0 0.0
    %607 = vmatprep.subr.mxu0 0.0
    %608 = vmatpush1.msra.mxu0 0.0
    %609 = vmatprep.subr.mxu0 0.0
    %610 = vmatpush1.msra.mxu0 0.0
    %611 = vmatprep.subr.mxu0 0.0
    %612 = vmatpush1.msra.mxu0 0.0
    %613 = vmatprep.subr.mxu0 0.0
    %614 = vmatpush1.msra.mxu0 0.0
    %615 = vmatprep.subr.mxu0 0.0
    %616 = vmatpush1.msra.mxu0 0.0
    %617 = vmatprep.subr.mxu0 0.0
    %618 = vmatpush1.msra.mxu0 0.0
    %619 = vmatprep.subr.mxu0 0.0
    %620 = vmatpush1.msra.mxu0 0.0
    %621 = vmatprep.subr.mxu0 0.0
    %622 = vmatpush1.msra.mxu0 0.0
    %623 = vmatprep.subr.mxu0 0.0
    %624 = vmatpush1.msra.mxu0 0.0
    %625 = vmatprep.subr.mxu0 0.0
    %626 = vmatpush1.msra.mxu0 %v386
    %627 = vmatprep.subr.mxu0 0.0
    %628 = vmatpush2.msra.mxu0 0.0
    %629 = vmatprep.subr.mxu0 0.0
    %630 = vmatpush2.msra.mxu0 0.0
    %631 = vmatprep.subr.mxu0 0.0
    %632 = vmatpush2.msra.mxu0 0.0
    %633 = vmatprep.subr.mxu0 0.0
    %634 = vmatpush2.msra.mxu0 0.0
    %635 = vmatprep.subr.mxu0 0.0
    %636 = vmatpush2.msra.mxu0 0.0
    %637 = vmatprep.subr.mxu0 0.0
    %638 = vmatpush2.msra.mxu0 0.0
    %639 = vmatprep.subr.mxu0 0.0
    %640 = vmatpush2.msra.mxu0 0.0
    %641 = vmatprep.subr.mxu0 0.0
    %642 = vmatpush2.msra.mxu0 0.0
    %643 = vmatprep.subr.mxu0 0.0
    %644 = vmatpush2.msra.mxu0 0.0
    %645 = vmatprep.subr.mxu0 0.0
    %646 = vmatpush2.msra.mxu0 0.0
    %647 = vmatprep.subr.mxu0 0.0
    %648 = vmatpush2.msra.mxu0 0.0
    %649 = vmatprep.subr.mxu0 0.0
    %650 = vmatpush2.msra.mxu0 0.0
    %651 = vmatprep.subr.mxu0 0.0
    %652 = vmatpush2.msra.mxu0 0.0
    %653 = vmatprep.subr.mxu0 0.0
    %654 = vmatpush2.msra.mxu0 0.0
    %655 = vmatprep.subr.mxu0 0.0
    %656 = vmatpush2.msra.mxu0 0.0
    %657 = vmatprep.subr.mxu0 0.0
    %658 = vmatpush2.msra.mxu0 0.0
    %659 = vmatprep.mubr.f32.mxu0 0.0
    %660 = vmatmul.mubr.f32.gmra.mxu0 %v593
    %v661 = vpop.f32.mrf.mxu0
    %v662 = vadd.f32 0.0, %v661
    %v663 = vpop.f32.mrf.mxu0
    %664 = vdwg.mxu0
    %v665 = vmul.f32 %v254, %v587
    %v666 = vsel %vm459, %v665, 0.0
    %v667 = vrot.slane %v666, 4
    %v668 = vadd.f32 %v666, %v667
    %v669 = vrot.slane %v668, 2
    %v670 = vadd.f32 %v668, %v669
    %v671 = vrot.slane %v670, 1
    %v672 = vadd.f32 %v670, %v671
    %v673 = vmul.f32 %v672, %v662
    %v675 = vrot.slane %v673, 7
    %vm677 = vcmask 1040384
    %v678 = vsel %vm677, %v467, %v675
    %v679 = vpack.c.bf16 %v678, %v678
    %v680 = vld [vmem:[%s6] sm:$0xf]
    %v681 = vld [vmem:[%s6 + $0x4] sm:$0xf]
    %v682 = vld [vmem:[%s6 + $0x8] sm:$0xf]
    %v683 = vld [vmem:[%s6 + $0xc] sm:$0xf]
    %v684 = vld [vmem:[%s7] sm:$0x1]
    %v686 = vlaneseq
    %v687 = vshrl.u32 %v686, 7
    %v688 = vsub.s32 0, %v687
    %v689 = vrot.slane %v684, %v688
    %v695 = vunpack.c.l.b16 %v680
    %v696 = vunpack.c.l.b16 %v681
    %v697 = vunpack.c.l.b16 %v682
    %v698 = vunpack.c.l.b16 %v683
    %v699 = vpack.c.b16 %v696, %v695
    %v700 = vpack.c.b16 %v698, %v697
    %v704 = vsel %vm60, %v679, 0
    %706 = vmatprep.subr.bf16.mxu0 0
    %707 = vmatpush1.bf16.msra.mxu0 0
    %708 = vmatprep.subr.bf16.mxu0 0
    %709 = vmatpush1.bf16.msra.mxu0 0
    %710 = vmatprep.subr.bf16.mxu0 0
    %711 = vmatpush1.bf16.msra.mxu0 0
    %712 = vmatprep.subr.bf16.mxu0 0
    %713 = vmatpush1.bf16.msra.mxu0 0
    %714 = vmatprep.subr.bf16.mxu0 0
    %715 = vmatpush1.bf16.msra.mxu0 0
    %716 = vmatprep.subr.bf16.mxu0 0
    %717 = vmatpush1.bf16.msra.mxu0 0
    %718 = vmatprep.subr.bf16.mxu0 0
    %719 = vmatpush1.bf16.msra.mxu0 %v700
    %720 = vmatprep.subr.bf16.mxu0 0
    %721 = vmatpush1.bf16.msra.mxu0 %v699
    %722 = vmatprep.subr.bf16.mxu0 0
    %723 = vmatpush2.bf16.msra.mxu0 0
    %724 = vmatprep.subr.bf16.mxu0 0
    %725 = vmatpush2.bf16.msra.mxu0 0
    %726 = vmatprep.subr.bf16.mxu0 0
    %727 = vmatpush2.bf16.msra.mxu0 0
    %728 = vmatprep.subr.bf16.mxu0 0
    %729 = vmatpush2.bf16.msra.mxu0 0
    %730 = vmatprep.subr.bf16.mxu0 0
    %731 = vmatpush2.bf16.msra.mxu0 0
    %732 = vmatprep.subr.bf16.mxu0 0
    %733 = vmatpush2.bf16.msra.mxu0 0
    %734 = vmatprep.subr.bf16.mxu0 0
    %735 = vmatpush2.bf16.msra.mxu0 0
    %736 = vmatprep.subr.bf16.mxu0 0
    %737 = vmatpush2.bf16.msra.mxu0 0
    %738 = vmatprep.mubr.bf16.mxu0 0
    %739 = vmatmul.mubr.bf16.gmra.mxu0 %v704
    %v740 = vpop.f32.mrf.mxu0
    %v741 = vadd.f32 %v689, %v740
    %v742 = vpop.f32.mrf.mxu0
    %v743 = vpop.f32.mrf.mxu0
    %v744 = vpop.f32.mrf.mxu0
    %745 = vdwg.mxu0
    %vm746 = vcmask 254976
    %747 = vst.msk [vmem:[#allocation2] sm:$0x3] %vm746, %v741
    // Predicated region
    $region38: #{multihead_attention_pooling.1} parent=1 // pred_check
      _
    $region39: #{multihead_attention_pooling.1} parent=1 // pred_check_branch
      %749 = sbr.rel (0) target = $region41
    $region40: #{multihead_attention_pooling.1} parent=1 // pred_region
      %s751 = ssub.s32 32, 32
      %752 = vsyncadd [#allocation3], %s751
      %s754 = sshll.u32 [#allocation2], 4
      %s755 = int_to_ptr.vmem [resolvable:$true] %s754
      %757 = dma.vmem_to_hbm [thread:$0]  %s755, 32, %s9, [#allocation3]
    $region41: #{multihead_attention_pooling.1} parent=1 // pred_fallthru
      _
    // Predicated region
    $region42: #{multihead_attention_pooling.1} parent=1 // pred_check
      _
    $region43: #{multihead_attention_pooling.1} parent=1 // pred_check_branch
      %759 = sbr.rel (0) target = $region45
    $region44: #{multihead_attention_pooling.1} parent=1 // pred_region
      %760 = dma.done [#allocation3], 32
    $region45: #{multihead_attention_pooling.1} parent=1 // pred_fallthru
      _
    %761 = vsyncpa [#allocation3], 1

</llo_original>
